<compile_context>
chip_gen: v6e
topology: v6e:2x2x1
jax: 0.10.0
libtpu: 0.0.40
codegen_flags: <defaults>
</compile_context>

<pallas_src>
import jax
import jax.numpy as jnp
from jax.experimental import pallas as pl
from jax.experimental.pallas import tpu as pltpu


def _round_up(x, m):
    return (x + m - 1) // m * m


def _cdiv(a, b):
    return (a + b - 1) // b


def _vmem_capacity_bytes():
    """Physical per-core VMEM; conservative 64 MiB fallback."""
    try:
        cap = int(pltpu.get_tpu_info().vmem_capacity_bytes)
        if cap > 0:
            return cap
    except Exception:
        pass
    return 64 * 1024 * 1024


def _select_tile_m(M, in_f, out_f, rank_p, io_itemsize, w_itemsize, tm_req, budget):
    """Largest M-tile that fits the VMEM budget (incl. f32 temporaries)."""
    sublane = max(8, 32 // io_itemsize)          # 8 f32 / 16 bf16 / 32 int8
    tm = max(sublane, _round_up(min(tm_req, _round_up(M, sublane)), sublane))
    # Keep >= 2 grid steps when M is large enough so the "parallel" M axis
    # actually shards across both TensorCores on v7x.
    if M >= 2 * sublane:
        tm = min(tm, _round_up(_cdiv(M, 2), sublane))
    # Conservative 2x on weights (covers the non-single-buffered fallback).
    weight_bytes = 2 * (in_f * rank_p + rank_p * out_f) * w_itemsize
    while tm > sublane:
        io_bytes = 2 * tm * (in_f + out_f) * io_itemsize      # double-buffered x/out
        tmp_bytes = tm * (rank_p + out_f) * 4                 # f32 xa + pre-cast out
        if io_bytes + tmp_bytes + weight_bytes + (1 << 20) <= budget:
            break
        tm = max(sublane, _round_up(tm // 2, sublane))
    return tm


def lora_kernel(x_ref, wa_ref, wb_ref, o_ref):
    # Two chained MXU matmuls, accumulated in f32.
    xa = jnp.dot(x_ref[...], wa_ref[...], preferred_element_type=jnp.float32)
    # Keep the (tm, rank_p) intermediate in f32 unless the weights are lower
    # precision, in which case downcast so both matmul operands match.
    if wb_ref.dtype != jnp.float32:
        xa = xa.astype(wb_ref.dtype)
    out = jnp.dot(xa, wb_ref[...], preferred_element_type=jnp.float32)
    o_ref[...] = out.astype(o_ref.dtype)


def lora_forward(x, wa, wb, *, tm=1024):
    """LoRA forward: out = x @ wa @ wb.

    x  : (..., in_features)
    wa : (in_features, rank)    == A.weight.T
    wb : (rank, out_features)   == B.weight.T
    """
    in_features, rank = wa.shape
    rank_b, out_features = wb.shape
    assert rank_b == rank and x.shape[-1] == in_features

    lead_shape = x.shape[:-1]
    x2d = x.reshape(-1, in_features)
    M = x2d.shape[0]
    io_itemsize = jnp.dtype(x.dtype).itemsize
    w_itemsize = jnp.dtype(wa.dtype).itemsize

    # ---- Lane-dense rank padding (weights only; x/out stream unpadded) -----
    rank_p = max(128, _round_up(rank, 128))
    if rank_p != rank:
        wa_p = jnp.zeros((in_features, rank_p), wa.dtype).at[:, :rank].set(wa)
        wb_p = jnp.zeros((rank_p, out_features), wb.dtype).at[:rank, :].set(wb)
    else:
        wa_p, wb_p = wa, wb

    # ---- Generation-gated VMEM budget & tile size ---------------------------
    capacity = _vmem_capacity_bytes()
    budget = max(32 * 1024 * 1024,
                 min(capacity - 12 * 1024 * 1024, capacity * 7 // 8))
    tile_m = _select_tile_m(M, in_features, out_features, rank_p,
                            io_itemsize, w_itemsize, tm, budget)
    grid_m = _cdiv(M, tile_m)

    weight_bytes = (in_features * rank_p + rank_p * out_features) * w_itemsize
    cost = pl.CostEstimate(
        flops=2 * M * rank_p * (in_features + out_features),
        transcendentals=0,
        bytes_accessed=(M * (in_features + out_features)) * io_itemsize
        + 2 * weight_bytes,
    )

    def build(single_buffer_weights):
        w_kwargs = (dict(pipeline_mode=pl.Buffered(1))
                    if single_buffer_weights else {})
        return pl.pallas_call(
            lora_kernel,
            out_shape=jax.ShapeDtypeStruct((M, out_features), x.dtype),
            grid_spec=pltpu.PrefetchScalarGridSpec(
                num_scalar_prefetch=0,
                grid=(grid_m,),
                in_specs=[
                    pl.BlockSpec((tile_m, in_features), lambda i: (i, 0)),
                    # Resident weights: constant block index across the M grid.
                    pl.BlockSpec((in_features, rank_p), lambda i: (0, 0),
                                 **w_kwargs),
                    pl.BlockSpec((rank_p, out_features), lambda i: (0, 0),
                                 **w_kwargs),
                ],
                out_specs=pl.BlockSpec((tile_m, out_features), lambda i: (i, 0)),
            ),
            compiler_params=pltpu.CompilerParams(
                dimension_semantics=("parallel",),   # M tiles shard across TCs
                vmem_limit_bytes=int(budget),
            ),
            cost_estimate=cost,
        )

    try:
        out2d = build(hasattr(pl, "Buffered"))(x2d, wa_p, wb_p)
    except Exception:
        # Fallback if single-buffered (Buffered(1)) weights are unsupported.
        out2d = build(False)(x2d, wa_p, wb_p)

    return out2d.reshape(*lead_shape, out_features)


if __name__ == "__main__":
    # Small shapes consistent with the module's forward.
    in_features, out_features, rank = 32, 32, 4
    batch, seq = 2, 8

    key = jax.random.PRNGKey(0)
    kx, ka, kb = jax.random.split(key, 3)

    # Deterministic init mirroring the PyTorch __init__:
    #   A.weight ~ N(0, 0.02), shape (rank, in_features)
    #   B.weight = 0,          shape (out_features, rank)
    A_weight = 0.02 * jax.random.normal(ka, (rank, in_features), dtype=jnp.float32)
    B_weight = jnp.zeros((out_features, rank), dtype=jnp.float32)

    wa = A_weight.T          # (in_features, rank)
    wb = B_weight.T          # (rank, out_features)
    x = jax.random.normal(kx, (batch, seq, in_features), dtype=jnp.float32)

    # 1) Spec-faithful run (zero-initialized B => output is exactly zero).
    out = jax.block_until_ready(lora_forward(x, wa, wb))
    ref = jnp.einsum("bsi,ir,ro->bso", x, wa, wb)
    assert out.shape == (batch, seq, out_features)
    assert jnp.allclose(out, ref, atol=1e-5), "mismatch vs reference (zero B)"

    # 2) Non-trivial weights to actually exercise the math.
    B_rand = 0.02 * jax.random.normal(kb, (out_features, rank), dtype=jnp.float32)
    out2 = jax.block_until_ready(lora_forward(x, wa, B_rand.T))
    ref2 = jnp.einsum("bsi,ir,ro->bso", x, wa, B_rand.T)
    assert jnp.allclose(out2, ref2, atol=1e-5), "mismatch vs reference (random B)"

    # 3) bf16 I/O path (halves HBM traffic on the mem-bound kernel).
    out3 = jax.block_until_ready(
        lora_forward(x.astype(jnp.bfloat16),
                     wa.astype(jnp.bfloat16),
                     B_rand.T.astype(jnp.bfloat16)))
    assert jnp.allclose(out3.astype(jnp.float32), ref2, atol=3e-2, rtol=3e-2), \
        "mismatch vs reference (bf16)"

    print("KERNEL_OK")
</pallas_src>

<mosaic_0001>
module attributes {stable_mosaic.version = 11 : i64} {
  func.func @lora_kernel(%arg0: i32, %arg1: memref<8x32xf32, #tpu.memory_space<vmem>>, %arg2: memref<32x128xf32, #tpu.memory_space<vmem>>, %arg3: memref<128x32xf32, #tpu.memory_space<vmem>>, %arg4: memref<8x32xf32, #tpu.memory_space<vmem>>) attributes {dimension_semantics = [#tpu.dimension_semantics<parallel>], iteration_bounds = array<i64: 2>, scalar_prefetch = 0 : i64, scratch_operands = 0 : i64, tpu.core_type = #tpu.core_type<tc>, window_params = [{transform_indices = @transform_0, window_bounds = array<i64: 8, 32>}, {pipeline_mode = #tpu.pipeline_mode<synchronous>, transform_indices = @transform_1, window_bounds = array<i64: 32, 128>}, {pipeline_mode = #tpu.pipeline_mode<synchronous>, transform_indices = @transform_2, window_bounds = array<i64: 128, 32>}, {transform_indices = @transform_3, window_bounds = array<i64: 8, 32>}]} {
    %c0 = arith.constant 0 : index
    %c0_0 = arith.constant 0 : index
    %0 = vector.load %arg1[%c0, %c0_0] : memref<8x32xf32, #tpu.memory_space<vmem>>, vector<8x32xf32>
    %c0_1 = arith.constant 0 : index
    %c0_2 = arith.constant 0 : index
    %1 = vector.load %arg2[%c0_1, %c0_2] : memref<32x128xf32, #tpu.memory_space<vmem>>, vector<32x128xf32>
    %cst = arith.constant dense<0.000000e+00> : vector<8x128xf32>
    %2 = tpu.matmul %0, %1, %cst {dimension_numbers = #tpu.dot_dimension_numbers<[1], [0], [0], [1], [0, 0, 1, 1], [], []>} : vector<8x32xf32>, vector<32x128xf32>, vector<8x128xf32> -> vector<8x128xf32>
    %c0_3 = arith.constant 0 : index
    %c0_4 = arith.constant 0 : index
    %3 = vector.load %arg3[%c0_3, %c0_4] : memref<128x32xf32, #tpu.memory_space<vmem>>, vector<128x32xf32>
    %cst_5 = arith.constant dense<0.000000e+00> : vector<8x32xf32>
    %4 = tpu.matmul %2, %3, %cst_5 {dimension_numbers = #tpu.dot_dimension_numbers<[1], [0], [0], [1], [0, 0, 1, 1], [], []>} : vector<8x128xf32>, vector<128x32xf32>, vector<8x32xf32> -> vector<8x32xf32>
    %c0_6 = arith.constant 0 : index
    %c0_7 = arith.constant 0 : index
    %5 = vector.load %arg4[%c0_6, %c0_7] : memref<8x32xf32, #tpu.memory_space<vmem>>, vector<8x32xf32>
    tpu.vector_store %arg4[%c0_6, %c0_7], %4 {strides = array<i32>} : memref<8x32xf32, #tpu.memory_space<vmem>>, vector<8x32xf32>,
    return
  }
  func.func @transform_0(%arg0: i32) -> (i32, i32) {
    %c0_i32 = arith.constant 0 : i32
    %c0_i32_0 = arith.constant 0 : i32
    return %arg0, %c0_i32 : i32, i32
  }
  func.func @transform_1(%arg0: i32) -> (i32, i32) {
    %c0_i32 = arith.constant 0 : i32
    %c0_i32_0 = arith.constant 0 : i32
    %c0_i32_1 = arith.constant 0 : i32
    return %c0_i32, %c0_i32_0 : i32, i32
  }
  func.func @transform_2(%arg0: i32) -> (i32, i32) {
    %c0_i32 = arith.constant 0 : i32
    %c0_i32_0 = arith.constant 0 : i32
    %c0_i32_1 = arith.constant 0 : i32
    return %c0_i32, %c0_i32_0 : i32, i32
  }
  func.func @transform_3(%arg0: i32) -> (i32, i32) {
    %c0_i32 = arith.constant 0 : i32
    %c0_i32_0 = arith.constant 0 : i32
    return %arg0, %c0_i32 : i32, i32
  }
}

module attributes {stable_mosaic.version = 11 : i64} {
  func.func @lora_kernel(%arg0: i32, %arg1: memref<8x32xf32, #tpu.memory_space<vmem>>, %arg2: memref<32x128xf32, #tpu.memory_space<vmem>>, %arg3: memref<128x32xf32, #tpu.memory_space<vmem>>, %arg4: memref<8x32xf32, #tpu.memory_space<vmem>>) attributes {dimension_semantics = [#tpu.dimension_semantics<parallel>], iteration_bounds = array<i64: 2>, scalar_prefetch = 0 : i64, scratch_operands = 0 : i64, tpu.core_type = #tpu.core_type<tc>, window_params = [{transform_indices = @transform_0, window_bounds = array<i64: 8, 32>}, {pipeline_mode = #tpu.pipeline_mode<synchronous>, transform_indices = @transform_1, window_bounds = array<i64: 32, 128>}, {pipeline_mode = #tpu.pipeline_mode<synchronous>, transform_indices = @transform_2, window_bounds = array<i64: 128, 32>}, {transform_indices = @transform_3, window_bounds = array<i64: 8, 32>}]} {
    %c0 = arith.constant 0 : index
    %c0_0 = arith.constant 0 : index
    %0 = vector.load %arg1[%c0, %c0_0] : memref<8x32xf32, #tpu.memory_space<vmem>>, vector<8x32xf32>
    %c0_1 = arith.constant 0 : index
    %c0_2 = arith.constant 0 : index
    %1 = vector.load %arg2[%c0_1, %c0_2] : memref<32x128xf32, #tpu.memory_space<vmem>>, vector<32x128xf32>
    %cst = arith.constant dense<0.000000e+00> : vector<8x128xf32>
    %2 = tpu.matmul %0, %1, %cst {dimension_numbers = #tpu.dot_dimension_numbers<[1], [0], [0], [1], [0, 0, 1, 1], [], []>} : vector<8x32xf32>, vector<32x128xf32>, vector<8x128xf32> -> vector<8x128xf32>
    %c0_3 = arith.constant 0 : index
    %c0_4 = arith.constant 0 : index
    %3 = vector.load %arg3[%c0_3, %c0_4] : memref<128x32xf32, #tpu.memory_space<vmem>>, vector<128x32xf32>
    %cst_5 = arith.constant dense<0.000000e+00> : vector<8x32xf32>
    %4 = tpu.matmul %2, %3, %cst_5 {dimension_numbers = #tpu.dot_dimension_numbers<[1], [0], [0], [1], [0, 0, 1, 1], [], []>} : vector<8x128xf32>, vector<128x32xf32>, vector<8x32xf32> -> vector<8x32xf32>
    %c0_6 = arith.constant 0 : index
    %c0_7 = arith.constant 0 : index
    %5 = vector.load %arg4[%c0_6, %c0_7] : memref<8x32xf32, #tpu.memory_space<vmem>>, vector<8x32xf32>
    tpu.vector_store %arg4[%c0_6, %c0_7], %4 {strides = array<i32>} : memref<8x32xf32, #tpu.memory_space<vmem>>, vector<8x32xf32>,
    return
  }
  func.func @transform_0(%arg0: i32) -> (i32, i32) {
    %c0_i32 = arith.constant 0 : i32
    %c0_i32_0 = arith.constant 0 : i32
    return %arg0, %c0_i32 : i32, i32
  }
  func.func @transform_1(%arg0: i32) -> (i32, i32) {
    %c0_i32 = arith.constant 0 : i32
    %c0_i32_0 = arith.constant 0 : i32
    %c0_i32_1 = arith.constant 0 : i32
    return %c0_i32, %c0_i32_0 : i32, i32
  }
  func.func @transform_2(%arg0: i32) -> (i32, i32) {
    %c0_i32 = arith.constant 0 : i32
    %c0_i32_0 = arith.constant 0 : i32
    %c0_i32_1 = arith.constant 0 : i32
    return %c0_i32, %c0_i32_0 : i32, i32
  }
  func.func @transform_3(%arg0: i32) -> (i32, i32) {
    %c0_i32 = arith.constant 0 : i32
    %c0_i32_0 = arith.constant 0 : i32
    return %arg0, %c0_i32 : i32, i32
  }
}

</mosaic_0001>

<llo_original>
// kernel: tpu_custom_call.1
$region0: #{tpu_custom_call.1}
  #allocation0 [shape = 'u32[]', space=smem, size = 0x4, offset = 0x4, fixed_abs, tag = 'smem constant byte address 0x4 - core index']
  #allocation1 [shape = 'u32[144,128]{1,0:T(1,128)}', space=vmem, size = 0x12000, scoped, tag = 'internal scratch']
  %s0 = inlined_call_operand.vmem [shape: f32[16,32], index: 0, kind: input, shape index: {}]
  %s1 = inlined_call_operand.vmem [shape: f32[32,128], index: 1, kind: input, shape index: {}]
  %s2 = inlined_call_operand.vmem [shape: f32[128,32], index: 2, kind: input, shape index: {}]
  %s3 = inlined_call_operand.hbm [shape: f32[16,32], index: 3, kind: output, shape index: {}]
  %s4 = sld [smem:[#allocation0]]
  $region45: #{tpu_custom_call.1} parent=0
    _
  %s6 = ssub.s32 1, %s4
  %s7 = scalar_select 0, %s6, %s4
  $region1: #{tpu_custom_call.1} parent=0
    #allocation2 [shape = 'u8[8192]{0}', space=vmem, size = 0x2000, scoped, tag = 'output window, operand 0']
    #allocation3 [shape = 's32[2]{0}', space=sflag, size = 0x8, scoped, tag = 'scoped memory for tpu_custom_call.1']
    %8 = vsyncpa [#allocation3], 0
    %s9 = scalar_lea.sflag [#allocation3], 1
    %10 = vsyncpa %s9, 0
    loop: start=0, step=1, limit=4
    $region2: #{tpu_custom_call.1} parent=1 // loop_pre_header
      _
    $region3: #{tpu_custom_call.1} parent=1 // loop_header
      %s12 = sphi 0, %s16
      %p13 = scmp.ge.s32.totalorder %s12, 4
      %s22 = sphi 0, %s24
      %s25 = sphi 0, %s22
      %s26 = sphi 0, %s25
      %s42 = sphi 0, %s26
      %s46 = sphi 0, %s46
      %s48 = sphi 0, %s46
      %s49 = sphi 0, %s48
      %s63 = sphi 0, %s49
      %s67 = sphi 0, %s67
      %s69 = sphi 0, %s67
      %s70 = sphi 0, %s69
      %s84 = sphi 0, %s70
      %s90 = sphi 0, %s92
      %s93 = sphi 0, %s90
      %s94 = sphi 0, %s93
      %s110 = sphi 0, %s94
    $region4: #{tpu_custom_call.1} parent=1 // loop_header_branch
      %15 = sbr.rel (%p13) target = $region8
    $region5: #{tpu_custom_call.1} parent=1 // loop_body
      %s17 = ssub.s32 %s12, 1
      %s18 = ssub.s32 %s12, 2
      %s19 = sadd.s32 %s12, 1
      %s20 = ssub.s32 %s12, %s19
      %p21 = scmp.eq.s32.totalorder %s20, 0
      %s23 = sadd.s32 %s22, 1
      %s24 = scalar_select %p21, %s22, %s23
      %p27 = pneg %p21
      %p28 = scmp.eq.s32.totalorder %s12, 1
      %p29 = por %p27, %p28
      %p30 = scmp.ne.s32.totalorder %s22, %s25
      %p31 = scmp.eq.s32.totalorder %s12, 0
      %p32 = por %p30, %p31
      %p33 = scmp.ne.s32.totalorder %s22, %s25
      %p34 = scmp.eq.s32.totalorder %s17, 1
      %p35 = por %p33, %p34
      %p36 = scmp.ne.s32.totalorder %s25, %s26
      %p37 = scmp.eq.s32.totalorder %s17, 0
      %p38 = por %p36, %p37
      %p39 = scmp.ne.s32.totalorder %s25, %s26
      %p40 = scmp.eq.s32.totalorder %s18, 1
      %p41 = por %p39, %p40
      %p43 = scmp.ne.s32.totalorder %s26, %s42
      %p44 = scmp.eq.s32.totalorder %s18, 0
      %p45 = por %p43, %p44
      %s47 = sadd.s32 %s46, 1
      %p50 = scmp.eq.s32.totalorder %s12, 1
      %p51 = scmp.ne.s32.totalorder %s46, %s48
      %p52 = scmp.eq.s32.totalorder %s12, 0
      %p53 = por %p51, %p52
      %p54 = scmp.ne.s32.totalorder %s46, %s48
      %p55 = scmp.eq.s32.totalorder %s17, 1
      %p56 = por %p54, %p55
      %p57 = scmp.ne.s32.totalorder %s48, %s49
      %p58 = scmp.eq.s32.totalorder %s17, 0
      %p59 = por %p57, %p58
      %p60 = scmp.ne.s32.totalorder %s48, %s49
      %p61 = scmp.eq.s32.totalorder %s18, 1
      %p62 = por %p60, %p61
      %p64 = scmp.ne.s32.totalorder %s49, %s63
      %p65 = scmp.eq.s32.totalorder %s18, 0
      %p66 = por %p64, %p65
      %s68 = sadd.s32 %s67, 1
      %p71 = scmp.eq.s32.totalorder %s12, 1
      %p72 = scmp.ne.s32.totalorder %s67, %s69
      %p73 = scmp.eq.s32.totalorder %s12, 0
      %p74 = por %p72, %p73
      %p75 = scmp.ne.s32.totalorder %s67, %s69
      %p76 = scmp.eq.s32.totalorder %s17, 1
      %p77 = por %p75, %p76
      %p78 = scmp.ne.s32.totalorder %s69, %s70
      %p79 = scmp.eq.s32.totalorder %s17, 0
      %p80 = por %p78, %p79
      %p81 = scmp.ne.s32.totalorder %s69, %s70
      %p82 = scmp.eq.s32.totalorder %s18, 1
      %p83 = por %p81, %p82
      %p85 = scmp.ne.s32.totalorder %s70, %s84
      %p86 = scmp.eq.s32.totalorder %s18, 0
      %p87 = por %p85, %p86
      %s88 = ssub.s32 %s12, %s19
      %p89 = scmp.eq.s32.totalorder %s88, 0
      %s91 = sadd.s32 %s90, 1
      %s92 = scalar_select %p89, %s90, %s91
      %p95 = pneg %p89
      %p96 = scmp.eq.s32.totalorder %s12, 1
      %p97 = por %p95, %p96
      %p98 = scmp.ne.s32.totalorder %s90, %s93
      %p99 = scmp.eq.s32.totalorder %s12, 0
      %p100 = por %p98, %p99
      %p101 = scmp.ne.s32.totalorder %s90, %s93
      %p102 = scmp.eq.s32.totalorder %s17, 1
      %p103 = por %p101, %p102
      %p104 = scmp.ne.s32.totalorder %s93, %s94
      %p105 = scmp.eq.s32.totalorder %s17, 0
      %p106 = por %p104, %p105
      %p107 = scmp.ne.s32.totalorder %s93, %s94
      %p108 = scmp.eq.s32.totalorder %s18, 1
      %p109 = por %p107, %p108
      %p111 = scmp.ne.s32.totalorder %s94, %s110
      %p112 = scmp.eq.s32.totalorder %s18, 0
      %p113 = por %p111, %p112
      %p114 = scmp.le.s32.totalorder 1, %s12
      %p115 = scmp.lt.s32.totalorder %s12, 3
      %p116 = pnand %p114, %p115
      %p117 = pneg %p116
      // Predicated region
      $region9: #{tpu_custom_call.1} parent=5 // pred_check
        _
      $region10: #{tpu_custom_call.1} parent=5 // pred_check_branch
        %119 = sbr.rel (%p116) target = $region12
      $region11: #{tpu_custom_call.1} parent=5 // pred_region
        %s120 = ssub.s32 %s12, 1
        // Predicated region
        $region13: #{tpu_custom_call.1} parent=11 // pred_check
          %p121 = pneg %p59
        $region14: #{tpu_custom_call.1} parent=11 // pred_check_branch
          %123 = sbr.rel (%p121) target = $region16
        $region15: #{tpu_custom_call.1} parent=11 // pred_region
          _
        $region16: #{tpu_custom_call.1} parent=11 // pred_fallthru
          _
        // Predicated region
        $region17: #{tpu_custom_call.1} parent=11 // pred_check
          %p124 = pneg %p80
        $region18: #{tpu_custom_call.1} parent=11 // pred_check_branch
          %126 = sbr.rel (%p124) target = $region20
        $region19: #{tpu_custom_call.1} parent=11 // pred_region
          _
        $region20: #{tpu_custom_call.1} parent=11 // pred_fallthru
          _
      $region12: #{tpu_custom_call.1} parent=5 // pred_fallthru
        _
      %p127 = scmp.lt.s32.totalorder %s12, 2
      // Predicated region
      $region21: #{tpu_custom_call.1} parent=5 // pred_check
        %p128 = pneg %p127
      $region22: #{tpu_custom_call.1} parent=5 // pred_check_branch
        %130 = sbr.rel (%p128) target = $region24
      $region23: #{tpu_custom_call.1} parent=5 // pred_region
        // Predicated region
        $region25: #{tpu_custom_call.1} parent=23 // pred_check
          %p131 = pneg %p32
        $region26: #{tpu_custom_call.1} parent=23 // pred_check_branch
          %133 = sbr.rel (%p131) target = $region28
        $region27: #{tpu_custom_call.1} parent=23 // pred_region
          %p134 = scmp.lt.s32.totalorder %s12, 1
          %s135 = scalar_select %p134, %s12, 1
          %s136 = smul.addr %s135, 8
          %s137 = scalar_lea.vmem %s0, %s136
        $region28: #{tpu_custom_call.1} parent=23 // pred_fallthru
          _
      $region24: #{tpu_custom_call.1} parent=5 // pred_fallthru
        _
      %p138 = scmp.le.s32.totalorder 1, %s12
      %p139 = scmp.lt.s32.totalorder %s12, 3
      %p140 = pnand %p138, %p139
      %p141 = pneg %p140
      // Predicated region
      $region29: #{tpu_custom_call.1} parent=5 // pred_check
        _
      $region30: #{tpu_custom_call.1} parent=5 // pred_check_branch
        %143 = sbr.rel (%p140) target = $region32
      $region31: #{tpu_custom_call.1} parent=5 // pred_region
        %s144 = ssub.s32 %s12, 1
        %p145 = scmp.lt.s32.totalorder %s17, 1
        %s146 = scalar_select %p145, %s17, 1
        %s147 = smul.addr %s146, 8
        %s148 = scalar_lea.vmem %s0, %s147
        %p149 = pneg %p38
        %p150 = pneg %p35
        %p151 = pneg %p59
        %p152 = pneg %p56
        %p153 = pneg %p80
        %p154 = pneg %p77
        %p155 = pneg %p106
        %p156 = pneg %p103
        %s157 = sand.u32 %s93, 1
        %s158 = scalar_lea.sflag [#allocation3], %s157
        %s159 = sand.u32 %s93, 1
        %s160 = smul.addr %s159, 8
        %s161 = scalar_lea.vmem [#allocation2], %s160
        %p162 = scmp.lt.s32.totalorder %s17, 1
        %s163 = scalar_select %p162, %s17, 1
        %s164 = smul.addr %s163, 8
        %s165 = scalar_lea.vmem %s0, %s164
        %v166 = vld [vmem:[%s165] sm:$0xff]
        %v167 = vld [vmem:[%s1] sm:$0xff]
        %v168 = vld [vmem:[%s1 + $0x8] sm:$0xff]
        %v169 = vld [vmem:[%s1 + $0x10] sm:$0xff]
        %v170 = vld [vmem:[%s1 + $0x18] sm:$0xff]
        %vm171 = vcmask 261120
        %v173 = vsel %vm171, %v166, 0
        %175 = vmatprep.subr.mxu0 0.0
        %176 = vmatpush1.msra.mxu0 0.0
        %177 = vmatprep.subr.mxu0 0.0
        %178 = vmatpush1.msra.mxu0 0.0
        %179 = vmatprep.subr.mxu0 0.0
        %180 = vmatpush1.msra.mxu0 0.0
        %181 = vmatprep.subr.mxu0 0.0
        %182 = vmatpush1.msra.mxu0 0.0
        %183 = vmatprep.subr.mxu0 0.0
        %184 = vmatpush1.msra.mxu0 0.0
        %185 = vmatprep.subr.mxu0 0.0
        %186 = vmatpush1.msra.mxu0 0.0
        %187 = vmatprep.subr.mxu0 0.0
        %188 = vmatpush1.msra.mxu0 0.0
        %189 = vmatprep.subr.mxu0 0.0
        %190 = vmatpush1.msra.mxu0 0.0
        %191 = vmatprep.subr.mxu0 0.0
        %192 = vmatpush1.msra.mxu0 0.0
        %193 = vmatprep.subr.mxu0 0.0
        %194 = vmatpush1.msra.mxu0 0.0
        %195 = vmatprep.subr.mxu0 0.0
        %196 = vmatpush1.msra.mxu0 0.0
        %197 = vmatprep.subr.mxu0 0.0
        %198 = vmatpush1.msra.mxu0 0.0
        %199 = vmatprep.subr.mxu0 0.0
        %200 = vmatpush1.msra.mxu0 %v170
        %201 = vmatprep.subr.mxu0 0.0
        %202 = vmatpush1.msra.mxu0 %v169
        %203 = vmatprep.subr.mxu0 0.0
        %204 = vmatpush1.msra.mxu0 %v168
        %205 = vmatprep.subr.mxu0 0.0
        %206 = vmatpush1.msra.mxu0 %v167
        %207 = vmatprep.subr.mxu0 0.0
        %208 = vmatpush2.msra.mxu0 0.0
        %209 = vmatprep.subr.mxu0 0.0
        %210 = vmatpush2.msra.mxu0 0.0
        %211 = vmatprep.subr.mxu0 0.0
        %212 = vmatpush2.msra.mxu0 0.0
        %213 = vmatprep.subr.mxu0 0.0
        %214 = vmatpush2.msra.mxu0 0.0
        %215 = vmatprep.subr.mxu0 0.0
        %216 = vmatpush2.msra.mxu0 0.0
        %217 = vmatprep.subr.mxu0 0.0
        %218 = vmatpush2.msra.mxu0 0.0
        %219 = vmatprep.subr.mxu0 0.0
        %220 = vmatpush2.msra.mxu0 0.0
        %221 = vmatprep.subr.mxu0 0.0
        %222 = vmatpush2.msra.mxu0 0.0
        %223 = vmatprep.subr.mxu0 0.0
        %224 = vmatpush2.msra.mxu0 0.0
        %225 = vmatprep.subr.mxu0 0.0
        %226 = vmatpush2.msra.mxu0 0.0
        %227 = vmatprep.subr.mxu0 0.0
        %228 = vmatpush2.msra.mxu0 0.0
        %229 = vmatprep.subr.mxu0 0.0
        %230 = vmatpush2.msra.mxu0 0.0
        %231 = vmatprep.subr.mxu0 0.0
        %232 = vmatpush2.msra.mxu0 0.0
        %233 = vmatprep.subr.mxu0 0.0
        %234 = vmatpush2.msra.mxu0 0.0
        %235 = vmatprep.subr.mxu0 0.0
        %236 = vmatpush2.msra.mxu0 0.0
        %237 = vmatprep.subr.mxu0 0.0
        %238 = vmatpush2.msra.mxu0 0.0
        %239 = vmatprep.mubr.f32.mxu0 0.0
        %240 = vmatmul.mubr.f32.gmra.mxu0 %v173
        %v241 = vpop.f32.mrf.mxu0
        %v242 = vadd.f32 0.0, %v241
        %v243 = vpop.f32.mrf.mxu0
        %244 = vdwg.mxu0
        %v245 = vld [vmem:[%s2] sm:$0xff]
        %v246 = vld [vmem:[%s2 + $0x8] sm:$0xff]
        %v247 = vld [vmem:[%s2 + $0x10] sm:$0xff]
        %v248 = vld [vmem:[%s2 + $0x18] sm:$0xff]
        %v249 = vld [vmem:[%s2 + $0x20] sm:$0xff]
        %v250 = vld [vmem:[%s2 + $0x28] sm:$0xff]
        %v251 = vld [vmem:[%s2 + $0x30] sm:$0xff]
        %v252 = vld [vmem:[%s2 + $0x38] sm:$0xff]
        %v253 = vld [vmem:[%s2 + $0x40] sm:$0xff]
        %v254 = vld [vmem:[%s2 + $0x48] sm:$0xff]
        %v255 = vld [vmem:[%s2 + $0x50] sm:$0xff]
        %v256 = vld [vmem:[%s2 + $0x58] sm:$0xff]
        %v257 = vld [vmem:[%s2 + $0x60] sm:$0xff]
        %v258 = vld [vmem:[%s2 + $0x68] sm:$0xff]
        %v259 = vld [vmem:[%s2 + $0x70] sm:$0xff]
        %v260 = vld [vmem:[%s2 + $0x78] sm:$0xff]
        %261 = vmatprep.subr.mxu0 0.0
        %262 = vmatpush1.msra.mxu0 %v260
        %263 = vmatprep.subr.mxu0 0.0
        %264 = vmatpush1.msra.mxu0 %v259
        %265 = vmatprep.subr.mxu0 0.0
        %266 = vmatpush1.msra.mxu0 %v258
        %267 = vmatprep.subr.mxu0 0.0
        %268 = vmatpush1.msra.mxu0 %v257
        %269 = vmatprep.subr.mxu0 0.0
        %270 = vmatpush1.msra.mxu0 %v256
        %271 = vmatprep.subr.mxu0 0.0
        %272 = vmatpush1.msra.mxu0 %v255
        %273 = vmatprep.subr.mxu0 0.0
        %274 = vmatpush1.msra.mxu0 %v254
        %275 = vmatprep.subr.mxu0 0.0
        %276 = vmatpush1.msra.mxu0 %v253
        %277 = vmatprep.subr.mxu0 0.0
        %278 = vmatpush1.msra.mxu0 %v252
        %279 = vmatprep.subr.mxu0 0.0
        %280 = vmatpush1.msra.mxu0 %v251
        %281 = vmatprep.subr.mxu0 0.0
        %282 = vmatpush1.msra.mxu0 %v250
        %283 = vmatprep.subr.mxu0 0.0
        %284 = vmatpush1.msra.mxu0 %v249
        %285 = vmatprep.subr.mxu0 0.0
        %286 = vmatpush1.msra.mxu0 %v248
        %287 = vmatprep.subr.mxu0 0.0
        %288 = vmatpush1.msra.mxu0 %v247
        %289 = vmatprep.subr.mxu0 0.0
        %290 = vmatpush1.msra.mxu0 %v246
        %291 = vmatprep.subr.mxu0 0.0
        %292 = vmatpush1.msra.mxu0 %v245
        %293 = vmatprep.subr.mxu0 0.0
        %294 = vmatpush2.msra.mxu0 0.0
        %295 = vmatprep.subr.mxu0 0.0
        %296 = vmatpush2.msra.mxu0 0.0
        %297 = vmatprep.subr.mxu0 0.0
        %298 = vmatpush2.msra.mxu0 0.0
        %299 = vmatprep.subr.mxu0 0.0
        %300 = vmatpush2.msra.mxu0 0.0
        %301 = vmatprep.subr.mxu0 0.0
        %302 = vmatpush2.msra.mxu0 0.0
        %303 = vmatprep.subr.mxu0 0.0
        %304 = vmatpush2.msra.mxu0 0.0
        %305 = vmatprep.subr.mxu0 0.0
        %306 = vmatpush2.msra.mxu0 0.0
        %307 = vmatprep.subr.mxu0 0.0
        %308 = vmatpush2.msra.mxu0 0.0
        %309 = vmatprep.subr.mxu0 0.0
        %310 = vmatpush2.msra.mxu0 0.0
        %311 = vmatprep.subr.mxu0 0.0
        %312 = vmatpush2.msra.mxu0 0.0
        %313 = vmatprep.subr.mxu0 0.0
        %314 = vmatpush2.msra.mxu0 0.0
        %315 = vmatprep.subr.mxu0 0.0
        %316 = vmatpush2.msra.mxu0 0.0
        %317 = vmatprep.subr.mxu0 0.0
        %318 = vmatpush2.msra.mxu0 0.0
        %319 = vmatprep.subr.mxu0 0.0
        %320 = vmatpush2.msra.mxu0 0.0
        %321 = vmatprep.subr.mxu0 0.0
        %322 = vmatpush2.msra.mxu0 0.0
        %323 = vmatprep.subr.mxu0 0.0
        %324 = vmatpush2.msra.mxu0 0.0
        %325 = vmatprep.mubr.f32.mxu0 0.0
        %326 = vmatmul.mubr.f32.gmra.mxu0 %v242
        %v327 = vpop.f32.mrf.mxu0
        %v328 = vadd.f32 0.0, %v327
        %v329 = vpop.f32.mrf.mxu0
        %330 = vdwg.mxu0
        %331 = vst.msk [vmem:[%s161] sm:$0xff] %vm171, %v328
        %s332 = sand.u32 %s93, 1
        %s333 = scalar_lea.sflag [#allocation3], %s332
        %s334 = sand.u32 %s93, 1
        %s335 = smul.addr %s334, 8
        %s336 = scalar_lea.vmem [#allocation2], %s335
        // Predicated region
        $region33: #{tpu_custom_call.1} parent=31 // pred_check
          %p337 = pneg %p103
        $region34: #{tpu_custom_call.1} parent=31 // pred_check_branch
          %339 = sbr.rel (%p337) target = $region36
        $region35: #{tpu_custom_call.1} parent=31 // pred_region
          %s341 = ssub.s32 128, 128
          %342 = vsyncadd %s333, %s341
          %s343 = smul.addr %s17, 128
          %s344 = scalar_lea.hbm %s3, %s343
          %s346 = sshll.u32 %s336, 4
          %s347 = int_to_ptr.vmem [resolvable:$true] %s346
          %349 = dma.vmem_to_hbm [thread:$0]  %s347, 128, %s344, %s333
        $region36: #{tpu_custom_call.1} parent=31 // pred_fallthru
          _
      $region32: #{tpu_custom_call.1} parent=5 // pred_fallthru
        _
      %p350 = scmp.le.s32.totalorder 2, %s12
      // Predicated region
      $region37: #{tpu_custom_call.1} parent=5 // pred_check
        %p351 = pneg %p350
      $region38: #{tpu_custom_call.1} parent=5 // pred_check_branch
        %353 = sbr.rel (%p351) target = $region40
      $region39: #{tpu_custom_call.1} parent=5 // pred_region
        %s354 = ssub.s32 %s12, 2
        // Predicated region
        $region41: #{tpu_custom_call.1} parent=39 // pred_check
          %p355 = pneg %p109
        $region42: #{tpu_custom_call.1} parent=39 // pred_check_branch
          %357 = sbr.rel (%p355) target = $region44
        $region43: #{tpu_custom_call.1} parent=39 // pred_region
          %s358 = sand.u32 %s94, 1
          %s359 = scalar_lea.sflag [#allocation3], %s358
          %s360 = sand.u32 %s94, 1
          %s361 = smul.addr %s360, 8
          %s362 = scalar_lea.vmem [#allocation2], %s361
          %363 = dma.done %s359, 128
        $region44: #{tpu_custom_call.1} parent=39 // pred_fallthru
          _
      $region40: #{tpu_custom_call.1} parent=5 // pred_fallthru
        _
    $region6: #{tpu_custom_call.1} parent=1 // loop_footer
      %s16 = sadd.s32 1, %s12
    $region7: #{tpu_custom_call.1} parent=1 // loop_footer_branch
      %11 = sbr.rel target = $region3
    $region8: #{tpu_custom_call.1} parent=1 // loop_exit
      _
    %364 = vsyncpa [#allocation3], 1
    %s365 = scalar_lea.sflag [#allocation3], 1
    %366 = vsyncpa %s365, 1

// kernel: tpu_custom_call.1
$region0: #{tpu_custom_call.1}
  #allocation0 [shape = 'u32[]', space=smem, size = 0x4, offset = 0x4, fixed_abs, tag = 'smem constant byte address 0x4 - core index']
  #allocation1 [shape = 'u32[144,128]{1,0:T(1,128)}', space=vmem, size = 0x12000, scoped, tag = 'internal scratch']
  %s0 = inlined_call_operand.vmem [shape: f32[16,32], index: 0, kind: input, shape index: {}]
  %s1 = inlined_call_operand.vmem [shape: f32[32,128], index: 1, kind: input, shape index: {}]
  %s2 = inlined_call_operand.vmem [shape: f32[128,32], index: 2, kind: input, shape index: {}]
  %s3 = inlined_call_operand.hbm [shape: f32[16,32], index: 3, kind: output, shape index: {}]
  %s4 = sld [smem:[#allocation0]]
  $region45: #{tpu_custom_call.1} parent=0
    _
  %s6 = ssub.s32 1, %s4
  %s7 = scalar_select 0, %s6, %s4
  $region1: #{tpu_custom_call.1} parent=0
    #allocation2 [shape = 'u8[8192]{0}', space=vmem, size = 0x2000, scoped, tag = 'output window, operand 0']
    #allocation3 [shape = 's32[2]{0}', space=sflag, size = 0x8, scoped, tag = 'scoped memory for tpu_custom_call.1']
    %8 = vsyncpa [#allocation3], 0
    %s9 = scalar_lea.sflag [#allocation3], 1
    %10 = vsyncpa %s9, 0
    loop: start=0, step=1, limit=4
    $region2: #{tpu_custom_call.1} parent=1 // loop_pre_header
      _
    $region3: #{tpu_custom_call.1} parent=1 // loop_header
      %s12 = sphi 0, %s16
      %p13 = scmp.ge.s32.totalorder %s12, 4
      %s22 = sphi 0, %s24
      %s25 = sphi 0, %s22
      %s26 = sphi 0, %s25
      %s42 = sphi 0, %s26
      %s46 = sphi 0, %s46
      %s48 = sphi 0, %s46
      %s49 = sphi 0, %s48
      %s63 = sphi 0, %s49
      %s67 = sphi 0, %s67
      %s69 = sphi 0, %s67
      %s70 = sphi 0, %s69
      %s84 = sphi 0, %s70
      %s90 = sphi 0, %s92
      %s93 = sphi 0, %s90
      %s94 = sphi 0, %s93
      %s110 = sphi 0, %s94
    $region4: #{tpu_custom_call.1} parent=1 // loop_header_branch
      %15 = sbr.rel (%p13) target = $region8
    $region5: #{tpu_custom_call.1} parent=1 // loop_body
      %s17 = ssub.s32 %s12, 1
      %s18 = ssub.s32 %s12, 2
      %s19 = sadd.s32 %s12, 1
      %s20 = ssub.s32 %s12, %s19
      %p21 = scmp.eq.s32.totalorder %s20, 0
      %s23 = sadd.s32 %s22, 1
      %s24 = scalar_select %p21, %s22, %s23
      %p27 = pneg %p21
      %p28 = scmp.eq.s32.totalorder %s12, 1
      %p29 = por %p27, %p28
      %p30 = scmp.ne.s32.totalorder %s22, %s25
      %p31 = scmp.eq.s32.totalorder %s12, 0
      %p32 = por %p30, %p31
      %p33 = scmp.ne.s32.totalorder %s22, %s25
      %p34 = scmp.eq.s32.totalorder %s17, 1
      %p35 = por %p33, %p34
      %p36 = scmp.ne.s32.totalorder %s25, %s26
      %p37 = scmp.eq.s32.totalorder %s17, 0
      %p38 = por %p36, %p37
      %p39 = scmp.ne.s32.totalorder %s25, %s26
      %p40 = scmp.eq.s32.totalorder %s18, 1
      %p41 = por %p39, %p40
      %p43 = scmp.ne.s32.totalorder %s26, %s42
      %p44 = scmp.eq.s32.totalorder %s18, 0
      %p45 = por %p43, %p44
      %s47 = sadd.s32 %s46, 1
      %p50 = scmp.eq.s32.totalorder %s12, 1
      %p51 = scmp.ne.s32.totalorder %s46, %s48
      %p52 = scmp.eq.s32.totalorder %s12, 0
      %p53 = por %p51, %p52
      %p54 = scmp.ne.s32.totalorder %s46, %s48
      %p55 = scmp.eq.s32.totalorder %s17, 1
      %p56 = por %p54, %p55
      %p57 = scmp.ne.s32.totalorder %s48, %s49
      %p58 = scmp.eq.s32.totalorder %s17, 0
      %p59 = por %p57, %p58
      %p60 = scmp.ne.s32.totalorder %s48, %s49
      %p61 = scmp.eq.s32.totalorder %s18, 1
      %p62 = por %p60, %p61
      %p64 = scmp.ne.s32.totalorder %s49, %s63
      %p65 = scmp.eq.s32.totalorder %s18, 0
      %p66 = por %p64, %p65
      %s68 = sadd.s32 %s67, 1
      %p71 = scmp.eq.s32.totalorder %s12, 1
      %p72 = scmp.ne.s32.totalorder %s67, %s69
      %p73 = scmp.eq.s32.totalorder %s12, 0
      %p74 = por %p72, %p73
      %p75 = scmp.ne.s32.totalorder %s67, %s69
      %p76 = scmp.eq.s32.totalorder %s17, 1
      %p77 = por %p75, %p76
      %p78 = scmp.ne.s32.totalorder %s69, %s70
      %p79 = scmp.eq.s32.totalorder %s17, 0
      %p80 = por %p78, %p79
      %p81 = scmp.ne.s32.totalorder %s69, %s70
      %p82 = scmp.eq.s32.totalorder %s18, 1
      %p83 = por %p81, %p82
      %p85 = scmp.ne.s32.totalorder %s70, %s84
      %p86 = scmp.eq.s32.totalorder %s18, 0
      %p87 = por %p85, %p86
      %s88 = ssub.s32 %s12, %s19
      %p89 = scmp.eq.s32.totalorder %s88, 0
      %s91 = sadd.s32 %s90, 1
      %s92 = scalar_select %p89, %s90, %s91
      %p95 = pneg %p89
      %p96 = scmp.eq.s32.totalorder %s12, 1
      %p97 = por %p95, %p96
      %p98 = scmp.ne.s32.totalorder %s90, %s93
      %p99 = scmp.eq.s32.totalorder %s12, 0
      %p100 = por %p98, %p99
      %p101 = scmp.ne.s32.totalorder %s90, %s93
      %p102 = scmp.eq.s32.totalorder %s17, 1
      %p103 = por %p101, %p102
      %p104 = scmp.ne.s32.totalorder %s93, %s94
      %p105 = scmp.eq.s32.totalorder %s17, 0
      %p106 = por %p104, %p105
      %p107 = scmp.ne.s32.totalorder %s93, %s94
      %p108 = scmp.eq.s32.totalorder %s18, 1
      %p109 = por %p107, %p108
      %p111 = scmp.ne.s32.totalorder %s94, %s110
      %p112 = scmp.eq.s32.totalorder %s18, 0
      %p113 = por %p111, %p112
      %p114 = scmp.le.s32.totalorder 1, %s12
      %p115 = scmp.lt.s32.totalorder %s12, 3
      %p116 = pnand %p114, %p115
      %p117 = pneg %p116
      // Predicated region
      $region9: #{tpu_custom_call.1} parent=5 // pred_check
        _
      $region10: #{tpu_custom_call.1} parent=5 // pred_check_branch
        %119 = sbr.rel (%p116) target = $region12
      $region11: #{tpu_custom_call.1} parent=5 // pred_region
        %s120 = ssub.s32 %s12, 1
        // Predicated region
        $region13: #{tpu_custom_call.1} parent=11 // pred_check
          %p121 = pneg %p59
        $region14: #{tpu_custom_call.1} parent=11 // pred_check_branch
          %123 = sbr.rel (%p121) target = $region16
        $region15: #{tpu_custom_call.1} parent=11 // pred_region
          _
        $region16: #{tpu_custom_call.1} parent=11 // pred_fallthru
          _
        // Predicated region
        $region17: #{tpu_custom_call.1} parent=11 // pred_check
          %p124 = pneg %p80
        $region18: #{tpu_custom_call.1} parent=11 // pred_check_branch
          %126 = sbr.rel (%p124) target = $region20
        $region19: #{tpu_custom_call.1} parent=11 // pred_region
          _
        $region20: #{tpu_custom_call.1} parent=11 // pred_fallthru
          _
      $region12: #{tpu_custom_call.1} parent=5 // pred_fallthru
        _
      %p127 = scmp.lt.s32.totalorder %s12, 2
      // Predicated region
      $region21: #{tpu_custom_call.1} parent=5 // pred_check
        %p128 = pneg %p127
      $region22: #{tpu_custom_call.1} parent=5 // pred_check_branch
        %130 = sbr.rel (%p128) target = $region24
      $region23: #{tpu_custom_call.1} parent=5 // pred_region
        // Predicated region
        $region25: #{tpu_custom_call.1} parent=23 // pred_check
          %p131 = pneg %p32
        $region26: #{tpu_custom_call.1} parent=23 // pred_check_branch
          %133 = sbr.rel (%p131) target = $region28
        $region27: #{tpu_custom_call.1} parent=23 // pred_region
          %p134 = scmp.lt.s32.totalorder %s12, 1
          %s135 = scalar_select %p134, %s12, 1
          %s136 = smul.addr %s135, 8
          %s137 = scalar_lea.vmem %s0, %s136
        $region28: #{tpu_custom_call.1} parent=23 // pred_fallthru
          _
      $region24: #{tpu_custom_call.1} parent=5 // pred_fallthru
        _
      %p138 = scmp.le.s32.totalorder 1, %s12
      %p139 = scmp.lt.s32.totalorder %s12, 3
      %p140 = pnand %p138, %p139
      %p141 = pneg %p140
      // Predicated region
      $region29: #{tpu_custom_call.1} parent=5 // pred_check
        _
      $region30: #{tpu_custom_call.1} parent=5 // pred_check_branch
        %143 = sbr.rel (%p140) target = $region32
      $region31: #{tpu_custom_call.1} parent=5 // pred_region
        %s144 = ssub.s32 %s12, 1
        %p145 = scmp.lt.s32.totalorder %s17, 1
        %s146 = scalar_select %p145, %s17, 1
        %s147 = smul.addr %s146, 8
        %s148 = scalar_lea.vmem %s0, %s147
        %p149 = pneg %p38
        %p150 = pneg %p35
        %p151 = pneg %p59
        %p152 = pneg %p56
        %p153 = pneg %p80
        %p154 = pneg %p77
        %p155 = pneg %p106
        %p156 = pneg %p103
        %s157 = sand.u32 %s93, 1
        %s158 = scalar_lea.sflag [#allocation3], %s157
        %s159 = sand.u32 %s93, 1
        %s160 = smul.addr %s159, 8
        %s161 = scalar_lea.vmem [#allocation2], %s160
        %p162 = scmp.lt.s32.totalorder %s17, 1
        %s163 = scalar_select %p162, %s17, 1
        %s164 = smul.addr %s163, 8
        %s165 = scalar_lea.vmem %s0, %s164
        %v166 = vld [vmem:[%s165] sm:$0xff]
        %v167 = vld [vmem:[%s1] sm:$0xff]
        %v168 = vld [vmem:[%s1 + $0x8] sm:$0xff]
        %v169 = vld [vmem:[%s1 + $0x10] sm:$0xff]
        %v170 = vld [vmem:[%s1 + $0x18] sm:$0xff]
        %vm171 = vcmask 261120
        %v173 = vsel %vm171, %v166, 0
        %175 = vmatprep.subr.mxu0 0.0
        %176 = vmatpush1.msra.mxu0 0.0
        %177 = vmatprep.subr.mxu0 0.0
        %178 = vmatpush1.msra.mxu0 0.0
        %179 = vmatprep.subr.mxu0 0.0
        %180 = vmatpush1.msra.mxu0 0.0
        %181 = vmatprep.subr.mxu0 0.0
        %182 = vmatpush1.msra.mxu0 0.0
        %183 = vmatprep.subr.mxu0 0.0
        %184 = vmatpush1.msra.mxu0 0.0
        %185 = vmatprep.subr.mxu0 0.0
        %186 = vmatpush1.msra.mxu0 0.0
        %187 = vmatprep.subr.mxu0 0.0
        %188 = vmatpush1.msra.mxu0 0.0
        %189 = vmatprep.subr.mxu0 0.0
        %190 = vmatpush1.msra.mxu0 0.0
        %191 = vmatprep.subr.mxu0 0.0
        %192 = vmatpush1.msra.mxu0 0.0
        %193 = vmatprep.subr.mxu0 0.0
        %194 = vmatpush1.msra.mxu0 0.0
        %195 = vmatprep.subr.mxu0 0.0
        %196 = vmatpush1.msra.mxu0 0.0
        %197 = vmatprep.subr.mxu0 0.0
        %198 = vmatpush1.msra.mxu0 0.0
        %199 = vmatprep.subr.mxu0 0.0
        %200 = vmatpush1.msra.mxu0 %v170
        %201 = vmatprep.subr.mxu0 0.0
        %202 = vmatpush1.msra.mxu0 %v169
        %203 = vmatprep.subr.mxu0 0.0
        %204 = vmatpush1.msra.mxu0 %v168
        %205 = vmatprep.subr.mxu0 0.0
        %206 = vmatpush1.msra.mxu0 %v167
        %207 = vmatprep.subr.mxu0 0.0
        %208 = vmatpush2.msra.mxu0 0.0
        %209 = vmatprep.subr.mxu0 0.0
        %210 = vmatpush2.msra.mxu0 0.0
        %211 = vmatprep.subr.mxu0 0.0
        %212 = vmatpush2.msra.mxu0 0.0
        %213 = vmatprep.subr.mxu0 0.0
        %214 = vmatpush2.msra.mxu0 0.0
        %215 = vmatprep.subr.mxu0 0.0
        %216 = vmatpush2.msra.mxu0 0.0
        %217 = vmatprep.subr.mxu0 0.0
        %218 = vmatpush2.msra.mxu0 0.0
        %219 = vmatprep.subr.mxu0 0.0
        %220 = vmatpush2.msra.mxu0 0.0
        %221 = vmatprep.subr.mxu0 0.0
        %222 = vmatpush2.msra.mxu0 0.0
        %223 = vmatprep.subr.mxu0 0.0
        %224 = vmatpush2.msra.mxu0 0.0
        %225 = vmatprep.subr.mxu0 0.0
        %226 = vmatpush2.msra.mxu0 0.0
        %227 = vmatprep.subr.mxu0 0.0
        %228 = vmatpush2.msra.mxu0 0.0
        %229 = vmatprep.subr.mxu0 0.0
        %230 = vmatpush2.msra.mxu0 0.0
        %231 = vmatprep.subr.mxu0 0.0
        %232 = vmatpush2.msra.mxu0 0.0
        %233 = vmatprep.subr.mxu0 0.0
        %234 = vmatpush2.msra.mxu0 0.0
        %235 = vmatprep.subr.mxu0 0.0
        %236 = vmatpush2.msra.mxu0 0.0
        %237 = vmatprep.subr.mxu0 0.0
        %238 = vmatpush2.msra.mxu0 0.0
        %239 = vmatprep.mubr.f32.mxu0 0.0
        %240 = vmatmul.mubr.f32.gmra.mxu0 %v173
        %v241 = vpop.f32.mrf.mxu0
        %v242 = vadd.f32 0.0, %v241
        %v243 = vpop.f32.mrf.mxu0
        %244 = vdwg.mxu0
        %v245 = vld [vmem:[%s2] sm:$0xff]
        %v246 = vld [vmem:[%s2 + $0x8] sm:$0xff]
        %v247 = vld [vmem:[%s2 + $0x10] sm:$0xff]
        %v248 = vld [vmem:[%s2 + $0x18] sm:$0xff]
        %v249 = vld [vmem:[%s2 + $0x20] sm:$0xff]
        %v250 = vld [vmem:[%s2 + $0x28] sm:$0xff]
        %v251 = vld [vmem:[%s2 + $0x30] sm:$0xff]
        %v252 = vld [vmem:[%s2 + $0x38] sm:$0xff]
        %v253 = vld [vmem:[%s2 + $0x40] sm:$0xff]
        %v254 = vld [vmem:[%s2 + $0x48] sm:$0xff]
        %v255 = vld [vmem:[%s2 + $0x50] sm:$0xff]
        %v256 = vld [vmem:[%s2 + $0x58] sm:$0xff]
        %v257 = vld [vmem:[%s2 + $0x60] sm:$0xff]
        %v258 = vld [vmem:[%s2 + $0x68] sm:$0xff]
        %v259 = vld [vmem:[%s2 + $0x70] sm:$0xff]
        %v260 = vld [vmem:[%s2 + $0x78] sm:$0xff]
        %261 = vmatprep.subr.mxu0 0.0
        %262 = vmatpush1.msra.mxu0 %v260
        %263 = vmatprep.subr.mxu0 0.0
        %264 = vmatpush1.msra.mxu0 %v259
        %265 = vmatprep.subr.mxu0 0.0
        %266 = vmatpush1.msra.mxu0 %v258
        %267 = vmatprep.subr.mxu0 0.0
        %268 = vmatpush1.msra.mxu0 %v257
        %269 = vmatprep.subr.mxu0 0.0
        %270 = vmatpush1.msra.mxu0 %v256
        %271 = vmatprep.subr.mxu0 0.0
        %272 = vmatpush1.msra.mxu0 %v255
        %273 = vmatprep.subr.mxu0 0.0
        %274 = vmatpush1.msra.mxu0 %v254
        %275 = vmatprep.subr.mxu0 0.0
        %276 = vmatpush1.msra.mxu0 %v253
        %277 = vmatprep.subr.mxu0 0.0
        %278 = vmatpush1.msra.mxu0 %v252
        %279 = vmatprep.subr.mxu0 0.0
        %280 = vmatpush1.msra.mxu0 %v251
        %281 = vmatprep.subr.mxu0 0.0
        %282 = vmatpush1.msra.mxu0 %v250
        %283 = vmatprep.subr.mxu0 0.0
        %284 = vmatpush1.msra.mxu0 %v249
        %285 = vmatprep.subr.mxu0 0.0
        %286 = vmatpush1.msra.mxu0 %v248
        %287 = vmatprep.subr.mxu0 0.0
        %288 = vmatpush1.msra.mxu0 %v247
        %289 = vmatprep.subr.mxu0 0.0
        %290 = vmatpush1.msra.mxu0 %v246
        %291 = vmatprep.subr.mxu0 0.0
        %292 = vmatpush1.msra.mxu0 %v245
        %293 = vmatprep.subr.mxu0 0.0
        %294 = vmatpush2.msra.mxu0 0.0
        %295 = vmatprep.subr.mxu0 0.0
        %296 = vmatpush2.msra.mxu0 0.0
        %297 = vmatprep.subr.mxu0 0.0
        %298 = vmatpush2.msra.mxu0 0.0
        %299 = vmatprep.subr.mxu0 0.0
        %300 = vmatpush2.msra.mxu0 0.0
        %301 = vmatprep.subr.mxu0 0.0
        %302 = vmatpush2.msra.mxu0 0.0
        %303 = vmatprep.subr.mxu0 0.0
        %304 = vmatpush2.msra.mxu0 0.0
        %305 = vmatprep.subr.mxu0 0.0
        %306 = vmatpush2.msra.mxu0 0.0
        %307 = vmatprep.subr.mxu0 0.0
        %308 = vmatpush2.msra.mxu0 0.0
        %309 = vmatprep.subr.mxu0 0.0
        %310 = vmatpush2.msra.mxu0 0.0
        %311 = vmatprep.subr.mxu0 0.0
        %312 = vmatpush2.msra.mxu0 0.0
        %313 = vmatprep.subr.mxu0 0.0
        %314 = vmatpush2.msra.mxu0 0.0
        %315 = vmatprep.subr.mxu0 0.0
        %316 = vmatpush2.msra.mxu0 0.0
        %317 = vmatprep.subr.mxu0 0.0
        %318 = vmatpush2.msra.mxu0 0.0
        %319 = vmatprep.subr.mxu0 0.0
        %320 = vmatpush2.msra.mxu0 0.0
        %321 = vmatprep.subr.mxu0 0.0
        %322 = vmatpush2.msra.mxu0 0.0
        %323 = vmatprep.subr.mxu0 0.0
        %324 = vmatpush2.msra.mxu0 0.0
        %325 = vmatprep.mubr.f32.mxu0 0.0
        %326 = vmatmul.mubr.f32.gmra.mxu0 %v242
        %v327 = vpop.f32.mrf.mxu0
        %v328 = vadd.f32 0.0, %v327
        %v329 = vpop.f32.mrf.mxu0
        %330 = vdwg.mxu0
        %331 = vst.msk [vmem:[%s161] sm:$0xff] %vm171, %v328
        %s332 = sand.u32 %s93, 1
        %s333 = scalar_lea.sflag [#allocation3], %s332
        %s334 = sand.u32 %s93, 1
        %s335 = smul.addr %s334, 8
        %s336 = scalar_lea.vmem [#allocation2], %s335
        // Predicated region
        $region33: #{tpu_custom_call.1} parent=31 // pred_check
          %p337 = pneg %p103
        $region34: #{tpu_custom_call.1} parent=31 // pred_check_branch
          %339 = sbr.rel (%p337) target = $region36
        $region35: #{tpu_custom_call.1} parent=31 // pred_region
          %s341 = ssub.s32 128, 128
          %342 = vsyncadd %s333, %s341
          %s343 = smul.addr %s17, 128
          %s344 = scalar_lea.hbm %s3, %s343
          %s346 = sshll.u32 %s336, 4
          %s347 = int_to_ptr.vmem [resolvable:$true] %s346
          %349 = dma.vmem_to_hbm [thread:$0]  %s347, 128, %s344, %s333
        $region36: #{tpu_custom_call.1} parent=31 // pred_fallthru
          _
      $region32: #{tpu_custom_call.1} parent=5 // pred_fallthru
        _
      %p350 = scmp.le.s32.totalorder 2, %s12
      // Predicated region
      $region37: #{tpu_custom_call.1} parent=5 // pred_check
        %p351 = pneg %p350
      $region38: #{tpu_custom_call.1} parent=5 // pred_check_branch
        %353 = sbr.rel (%p351) target = $region40
      $region39: #{tpu_custom_call.1} parent=5 // pred_region
        %s354 = ssub.s32 %s12, 2
        // Predicated region
        $region41: #{tpu_custom_call.1} parent=39 // pred_check
          %p355 = pneg %p109
        $region42: #{tpu_custom_call.1} parent=39 // pred_check_branch
          %357 = sbr.rel (%p355) target = $region44
        $region43: #{tpu_custom_call.1} parent=39 // pred_region
          %s358 = sand.u32 %s94, 1
          %s359 = scalar_lea.sflag [#allocation3], %s358
          %s360 = sand.u32 %s94, 1
          %s361 = smul.addr %s360, 8
          %s362 = scalar_lea.vmem [#allocation2], %s361
          %363 = dma.done %s359, 128
        $region44: #{tpu_custom_call.1} parent=39 // pred_fallthru
          _
      $region40: #{tpu_custom_call.1} parent=5 // pred_fallthru
        _
    $region6: #{tpu_custom_call.1} parent=1 // loop_footer
      %s16 = sadd.s32 1, %s12
    $region7: #{tpu_custom_call.1} parent=1 // loop_footer_branch
      %11 = sbr.rel target = $region3
    $region8: #{tpu_custom_call.1} parent=1 // loop_exit
      _
    %364 = vsyncpa [#allocation3], 1
    %s365 = scalar_lea.sflag [#allocation3], 1
    %366 = vsyncpa %s365, 1

</llo_original>
